<compile_context>
chip_gen: v7x
topology: tpu7x:2x2x1
jax: 0.10.0
libtpu: 0.0.40
codegen_flags: <defaults>
</compile_context>

<pallas_src>
import functools

import jax
import jax.numpy as jnp
import numpy as np
from jax.experimental import pallas as pl
from jax.experimental.pallas import tpu as pltpu

LANES = 128  # f32 lane width of a TPU vreg tile


# ----------------------------------------------------------------------------
# Static shape bookkeeping (mirrors PyTorch Conv1d / MaxPool1d semantics)
# ----------------------------------------------------------------------------
def _layer_dims(input_shape, hp):
    N, Cin, L = input_shape
    dims = []
    cur_len, cur_c = L, Cin
    for i in range(hp["num_layers"]):
        K = hp["kernel_size"][i]
        s = hp["stride"][i]
        p = hp["pool_size"][i]
        Cout = hp["filters"][i]
        # TODO(synk): stride > 1 would need strided row reads (pl.ds(..., stride));
        # not needed for this configuration.
        assert s == 1, "fused kernel only supports Conv1d stride == 1"
        assert Cout <= LANES, "fused kernel packs channels onto the 128-lane axis"
        L_out = (cur_len - K) // s + 1
        L_pool = L_out // p            # MaxPool1d: default stride == kernel, floor mode
        assert L_out >= 1 and L_pool >= 1, "a layer collapsed to zero length"
        dims.append(dict(L_in=cur_len, Cin=cur_c, Cout=Cout, K=K, pool=p,
                         L_out=L_out, L_pool=L_pool))
        cur_len, cur_c = L_pool, Cout
    return dims


# ----------------------------------------------------------------------------
# Single fused kernel: all conv blocks + avg-pool + linear head (per sample)
# ----------------------------------------------------------------------------
def make_fused_cnn(input_shape, hp):
    N, Cin0, L0 = input_shape
    dims = _layer_dims(input_shape, hp)
    num_layers = hp["num_layers"]
    relu = hp["activation"] == "relu"

    def kernel(*refs):
        x_ref, out_ref = refs[0], refs[-1]
        p_refs = refs[1:-1]                    # w0, b0, w1, b1, ..., fc_w, fc_b

        x = x_ref[...]                         # (Cin0, L0): native channels-first sample
        for i, d in enumerate(dims):
            K, pool = d["K"], d["pool"]
            L_keep = d["L_pool"] * pool        # rows the pool will consume
            w_big = p_refs[2 * i][...]         # (Cin | 128, K*128): lane-tile packed taps
            b = p_refs[2 * i + 1][...]         # (1, 128): zero-padded bias

            if i == 0:
                # Contract over the channel axis of the native (C, L) layout -- this is
                # the fused NCL->NLC "transpose" (one dot_general, no wrapper op).
                y = jax.lax.dot_general(x, w_big, (((0,), (0,)), ((), ())),
                                        preferred_element_type=jnp.float32)
            else:
                # (L, 128) @ (128, K*128): MXU-native 128-wide contraction; padded rows
                # of w_big are zero so the padded lanes of x contribute nothing.
                y = jnp.dot(x, w_big, preferred_element_type=jnp.float32)

            # y: (L_in, K*128).  Tap k lives in the k-th 128-lane tile column; rows are
            # input positions.  Combine taps: acc[l, :] = sum_k y[l + k, tile k].
            acc = y[0:L_keep, 0:LANES]
            for k in range(1, K):
                acc = acc + y[k:k + L_keep, k * LANES:(k + 1) * LANES]
            acc = acc + b
            acc = jnp.maximum(acc, 0.0) if relu else jnp.tanh(acc)

            # MaxPool1d(pool), floor mode, without a rank-4 sublane-splitting reshape:
            # fold the pool window onto lanes, then max 128-lane-aligned column blocks.
            acc = acc.reshape(d["L_pool"], pool * LANES)
            xp = acc[:, 0:LANES]
            for p in range(1, pool):
                xp = jnp.maximum(xp, acc[:, p * LANES:(p + 1) * LANES])
            x = xp                             # (L_pool, 128); lanes >= Cout stay zero

        # AdaptiveAvgPool1d(1) + Flatten + Linear(C, 1) on the VPU/XLU.  Padded lanes are
        # exactly zero in both the features and fc_w, so the lane reduction is exact.
        feat = jnp.mean(x, axis=0, keepdims=True)        # (1, 128)
        fc_w = p_refs[-2][...]                           # (1, 128)
        fc_b = p_refs[-1][...]                           # (1, 1)
        val = jnp.sum(feat * fc_w, axis=-1, keepdims=True) + fc_b   # (1, 1)
        out_ref[...] = jnp.broadcast_to(val, (1, LANES))  # lane-dense store

    # ---- specs: one sample per grid step; params resident (constant index maps) ----
    in_specs = [pl.BlockSpec((None, Cin0, L0), lambda n: (n, 0, 0))]
    for i, d in enumerate(dims):
        rows = d["Cin"] if i == 0 else LANES
        in_specs.append(pl.BlockSpec((rows, d["K"] * LANES), lambda n: (0, 0)))
        in_specs.append(pl.BlockSpec((1, LANES), lambda n: (0, 0)))
    in_specs.append(pl.BlockSpec((1, LANES), lambda n: (0, 0)))      # fc_w
    in_specs.append(pl.BlockSpec((1, 1), lambda n: (0, 0)))          # fc_b
    out_specs = pl.BlockSpec((None, 1, LANES), lambda n: (n, 0, 0))

    # ---- advisory cost estimate (real, un-padded flops) ----
    flops = 0
    trans = 0
    for d in dims:
        flops += 2 * N * d["L_out"] * d["Cin"] * d["K"] * d["Cout"]
        if not relu:
            trans += N * d["L_pool"] * d["pool"] * d["Cout"]
    flops += 2 * N * dims[-1]["Cout"]
    bytes_params = 0
    for i, d in enumerate(dims):
        rows = d["Cin"] if i == 0 else LANES
        bytes_params += rows * d["K"] * LANES * 4 + LANES * 4
    bytes_params += LANES * 4 + 4
    bytes_accessed = N * Cin0 * L0 * 4 + bytes_params + N * LANES * 4

    return pl.pallas_call(
        kernel,
        out_shape=jax.ShapeDtypeStruct((N, 1, LANES), jnp.float32),
        grid=(N,),
        in_specs=in_specs,
        out_specs=out_specs,
        compiler_params=pltpu.CompilerParams(
            dimension_semantics=("parallel",)),
        cost_estimate=pl.CostEstimate(
            flops=flops, transcendentals=trans, bytes_accessed=bytes_accessed),
    )


# ----------------------------------------------------------------------------
# One-time parameter layout preparation (hoisted out of the forward pass)
# ----------------------------------------------------------------------------
def prepare_params(params, hp):
    """conv{i}_w (Cout,Cin,K) -> W_big with tap k on lanes [k*128, k*128+Cout) (zeros
    elsewhere); layers >= 1 also zero-pad the contraction rows to 128.  Biases / fc_w
    are zero-padded to 128 lanes; fc_b -> (1, 1)."""
    prepared = []
    for i in range(hp["num_layers"]):
        w = params[f"conv{i}_w"]                       # (Cout, Cin, K)
        b = params[f"conv{i}_b"]                       # (Cout,)
        Cout, Cin, K = w.shape
        wt = jnp.transpose(w, (1, 2, 0))               # (Cin, K, Cout)
        wt = jnp.pad(wt, ((0, 0), (0, 0), (0, LANES - Cout)))   # (Cin, K, 128)
        w_big = wt.reshape(Cin, K * LANES)             # [ci, k*128+co] = w[co, ci, k]
        if i > 0:
            w_big = jnp.pad(w_big, ((0, LANES - Cin), (0, 0)))  # (128, K*128)
        prepared.append(w_big.astype(jnp.float32))
        prepared.append(jnp.pad(b, (0, LANES - Cout)).reshape(1, LANES).astype(jnp.float32))
    fc_w = params["fc_w"].reshape(-1)
    prepared.append(jnp.pad(fc_w, (0, LANES - fc_w.shape[0]))
                    .reshape(1, LANES).astype(jnp.float32))
    prepared.append(params["fc_b"].reshape(1, 1).astype(jnp.float32))
    return prepared


# ----------------------------------------------------------------------------
# Forward pass: exactly one fused Pallas custom call (no wrapper transpose)
# ----------------------------------------------------------------------------
def cnn_forward(x_ncl, prepared_params, hp):
    fused = make_fused_cnn(x_ncl.shape, hp)
    out = fused(x_ncl, *prepared_params)     # (N, 1, 128), lane-broadcast scalar
    return out[:, 0, :1]                     # (N, 1)


# ----------------------------------------------------------------------------
# Pure-JAX reference (correctness check only)
# ----------------------------------------------------------------------------
def cnn_forward_ref(x_ncl, params, hp):
    x = x_ncl  # (N, C, L)
    for i in range(hp["num_layers"]):
        w = params[f"conv{i}_w"]            # (Cout, Cin, K)
        b = params[f"conv{i}_b"]
        K = hp["kernel_size"][i]
        s = hp["stride"][i]
        p = hp["pool_size"][i]
        L = x.shape[2]
        L_out = (L - K) // s + 1
        cols = jnp.stack([x[:, :, k:k + s * L_out:s] for k in range(K)], axis=-1)
        y = jnp.einsum("ncls,ocs->nol", cols, w) + b[None, :, None]
        y = jnp.maximum(y, 0.0) if hp["activation"] == "relu" else jnp.tanh(y)
        L_pool = L_out // p
        y = jnp.max(y[:, :, :L_pool * p].reshape(y.shape[0], y.shape[1], L_pool, p),
                    axis=-1)
        x = y
    pooled = jnp.mean(x, axis=2)            # AdaptiveAvgPool1d(1) + Flatten
    return pooled @ params["fc_w"].T + params["fc_b"]


# ----------------------------------------------------------------------------
# Deterministic parameter init (shapes from the PyTorch __init__)
# ----------------------------------------------------------------------------
def init_params(key, input_shape, hp):
    params = {}
    in_channels = input_shape[1]
    for i in range(hp["num_layers"]):
        Cout = hp["filters"][i]
        K = hp["kernel_size"][i]
        key, kw, kb = jax.random.split(key, 3)
        params[f"conv{i}_w"] = 0.1 * jax.random.normal(
            kw, (Cout, in_channels, K), jnp.float32)
        params[f"conv{i}_b"] = 0.1 * jax.random.normal(kb, (Cout,), jnp.float32)
        in_channels = Cout
    key, kw, kb = jax.random.split(key, 3)
    params["fc_w"] = 0.1 * jax.random.normal(kw, (1, in_channels), jnp.float32)
    params["fc_b"] = 0.1 * jax.random.normal(kb, (1,), jnp.float32)
    return params


if __name__ == "__main__":
    hp = {
        "num_layers": 2,
        "filters": [8, 16],
        "kernel_size": [3, 3],
        "stride": [1, 1],
        "activation": "relu",
        "pool_size": [2, 2],
    }
    input_shape = (2, 4, 32)  # (batch, channels, length), PyTorch NCL

    key = jax.random.PRNGKey(0)
    key, kx = jax.random.split(key)
    x = jax.random.normal(kx, input_shape, jnp.float32)
    params = init_params(key, input_shape, hp)

    prepared = prepare_params(params, hp)    # one-time layout prep, outside fwd
    fwd = jax.jit(functools.partial(cnn_forward, hp=hp))

    out = jax.block_until_ready(fwd(x, prepared))

    ref = cnn_forward_ref(x, params, hp)
    assert out.shape == (input_shape[0], 1)
    np.testing.assert_allclose(np.asarray(out), np.asarray(ref), atol=1e-4, rtol=1e-4)

    print("KERNEL_OK")
</pallas_src>

<mosaic_0001>
module attributes {stable_mosaic.version = 11 : i64} {
  func.func @kernel(%arg0: i32, %arg1: memref<1x4x32xf32, #tpu.memory_space<vmem>>, %arg2: memref<4x384xf32, #tpu.memory_space<vmem>>, %arg3: memref<1x128xf32, #tpu.memory_space<vmem>>, %arg4: memref<128x384xf32, #tpu.memory_space<vmem>>, %arg5: memref<1x128xf32, #tpu.memory_space<vmem>>, %arg6: memref<1x128xf32, #tpu.memory_space<vmem>>, %arg7: memref<1x1xf32, #tpu.memory_space<vmem>>, %arg8: memref<1x1x128xf32, #tpu.memory_space<vmem>>) attributes {dimension_semantics = [#tpu.dimension_semantics<parallel>], iteration_bounds = array<i64: 2>, scalar_prefetch = 0 : i64, scratch_operands = 0 : i64, tpu.core_type = #tpu.core_type<tc>, window_params = [{transform_indices = @transform_0, window_bounds = array<i64: 1, 4, 32>}, {pipeline_mode = #tpu.pipeline_mode<synchronous>, transform_indices = @transform_1, window_bounds = array<i64: 4, 384>}, {pipeline_mode = #tpu.pipeline_mode<synchronous>, transform_indices = @transform_2, window_bounds = array<i64: 1, 128>}, {pipeline_mode = #tpu.pipeline_mode<synchronous>, transform_indices = @transform_3, window_bounds = array<i64: 128, 384>}, {pipeline_mode = #tpu.pipeline_mode<synchronous>, transform_indices = @transform_4, window_bounds = array<i64: 1, 128>}, {pipeline_mode = #tpu.pipeline_mode<synchronous>, transform_indices = @transform_5, window_bounds = array<i64: 1, 128>}, {pipeline_mode = #tpu.pipeline_mode<synchronous>, transform_indices = @transform_6, window_bounds = array<i64: 1, 1>}, {transform_indices = @transform_7, window_bounds = array<i64: 1, 1, 128>}]} {
    %c0 = arith.constant 0 : index
    %c0_0 = arith.constant 0 : index
    %c0_1 = arith.constant 0 : index
    %0 = vector.load %arg1[%c0, %c0_0, %c0_1] : memref<1x4x32xf32, #tpu.memory_space<vmem>>, vector<1x4x32xf32>
    %1 = vector.shape_cast %0 : vector<1x4x32xf32> to vector<4x32xf32>
    %c0_2 = arith.constant 0 : index
    %c0_3 = arith.constant 0 : index
    %2 = vector.load %arg2[%c0_2, %c0_3] : memref<4x384xf32, #tpu.memory_space<vmem>>, vector<4x384xf32>
    %c0_4 = arith.constant 0 : index
    %c0_5 = arith.constant 0 : index
    %3 = vector.load %arg3[%c0_4, %c0_5] : memref<1x128xf32, #tpu.memory_space<vmem>>, vector<1x128xf32>
    %cst = arith.constant dense<0.000000e+00> : vector<32x384xf32>
    %4 = tpu.matmul %1, %2, %cst {dimension_numbers = #tpu.dot_dimension_numbers<[0], [0], [1], [1], [0, 1, 1, 1], [], []>} : vector<4x32xf32>, vector<4x384xf32>, vector<32x384xf32> -> vector<32x384xf32>
    %5 = vector.extract_strided_slice %4 {offsets = [0, 0], sizes = [30, 128], strides = [1, 1]} : vector<32x384xf32> to vector<30x128xf32>
    %6 = vector.extract_strided_slice %4 {offsets = [1, 128], sizes = [30, 128], strides = [1, 1]} : vector<32x384xf32> to vector<30x128xf32>
    %7 = arith.addf %5, %6 : vector<30x128xf32>
    %8 = vector.extract_strided_slice %4 {offsets = [2, 256], sizes = [30, 128], strides = [1, 1]} : vector<32x384xf32> to vector<30x128xf32>
    %9 = arith.addf %7, %8 : vector<30x128xf32>
    %10 = vector.broadcast %3 : vector<1x128xf32> to vector<30x128xf32>
    %11 = arith.addf %9, %10 : vector<30x128xf32>
    %cst_6 = arith.constant 0.000000e+00 : f32
    %12 = vector.broadcast %cst_6 : f32 to vector<30x128xf32>
    %13 = arith.maximumf %11, %12 : vector<30x128xf32>
    %14 = vector.shape_cast %13 : vector<30x128xf32> to vector<15x256xf32>
    %15 = vector.extract_strided_slice %14 {offsets = [0, 0], sizes = [15, 128], strides = [1, 1]} : vector<15x256xf32> to vector<15x128xf32>
    %16 = vector.extract_strided_slice %14 {offsets = [0, 128], sizes = [15, 128], strides = [1, 1]} : vector<15x256xf32> to vector<15x128xf32>
    %17 = arith.maximumf %15, %16 : vector<15x128xf32>
    %c0_7 = arith.constant 0 : index
    %c0_8 = arith.constant 0 : index
    %18 = vector.load %arg4[%c0_7, %c0_8] : memref<128x384xf32, #tpu.memory_space<vmem>>, vector<128x384xf32>
    %c0_9 = arith.constant 0 : index
    %c0_10 = arith.constant 0 : index
    %19 = vector.load %arg5[%c0_9, %c0_10] : memref<1x128xf32, #tpu.memory_space<vmem>>, vector<1x128xf32>
    %cst_11 = arith.constant dense<0.000000e+00> : vector<15x384xf32>
    %20 = tpu.matmul %17, %18, %cst_11 {dimension_numbers = #tpu.dot_dimension_numbers<[1], [0], [0], [1], [0, 0, 1, 1], [], []>} : vector<15x128xf32>, vector<128x384xf32>, vector<15x384xf32> -> vector<15x384xf32>
    %21 = vector.extract_strided_slice %20 {offsets = [0, 0], sizes = [12, 128], strides = [1, 1]} : vector<15x384xf32> to vector<12x128xf32>
    %22 = vector.extract_strided_slice %20 {offsets = [1, 128], sizes = [12, 128], strides = [1, 1]} : vector<15x384xf32> to vector<12x128xf32>
    %23 = arith.addf %21, %22 : vector<12x128xf32>
    %24 = vector.extract_strided_slice %20 {offsets = [2, 256], sizes = [12, 128], strides = [1, 1]} : vector<15x384xf32> to vector<12x128xf32>
    %25 = arith.addf %23, %24 : vector<12x128xf32>
    %26 = vector.broadcast %19 : vector<1x128xf32> to vector<12x128xf32>
    %27 = arith.addf %25, %26 : vector<12x128xf32>
    %cst_12 = arith.constant 0.000000e+00 : f32
    %28 = vector.broadcast %cst_12 : f32 to vector<12x128xf32>
    %29 = arith.maximumf %27, %28 : vector<12x128xf32>
    %30 = vector.shape_cast %29 : vector<12x128xf32> to vector<6x256xf32>
    %31 = vector.extract_strided_slice %30 {offsets = [0, 0], sizes = [6, 128], strides = [1, 1]} : vector<6x256xf32> to vector<6x128xf32>
    %32 = vector.extract_strided_slice %30 {offsets = [0, 128], sizes = [6, 128], strides = [1, 1]} : vector<6x256xf32> to vector<6x128xf32>
    %33 = arith.maximumf %31, %32 : vector<6x128xf32>
    %cst_13 = arith.constant dense<0.000000e+00> : vector<128xf32>
    %34 = vector.multi_reduction <add>, %33, %cst_13 [0] : vector<6x128xf32> to vector<128xf32>
    %35 = vector.shape_cast %34 : vector<128xf32> to vector<1x128xf32>
    %cst_14 = arith.constant 6.000000e+00 : f32
    %36 = vector.broadcast %cst_14 : f32 to vector<1x128xf32>
    %37 = arith.divf %35, %36 : vector<1x128xf32>
    %c0_15 = arith.constant 0 : index
    %c0_16 = arith.constant 0 : index
    %38 = vector.load %arg6[%c0_15, %c0_16] : memref<1x128xf32, #tpu.memory_space<vmem>>, vector<1x128xf32>
    %c0_17 = arith.constant 0 : index
    %c0_18 = arith.constant 0 : index
    %39 = vector.load %arg7[%c0_17, %c0_18] : memref<1x1xf32, #tpu.memory_space<vmem>>, vector<1x1xf32>
    %40 = arith.mulf %37, %38 : vector<1x128xf32>
    %cst_19 = arith.constant dense<0.000000e+00> : vector<1xf32>
    %41 = vector.multi_reduction <add>, %40, %cst_19 [1] : vector<1x128xf32> to vector<1xf32>
    %42 = vector.shape_cast %41 : vector<1xf32> to vector<1x1xf32>
    %43 = arith.addf %42, %39 : vector<1x1xf32>
    %44 = vector.shape_cast %43 : vector<1x1xf32> to vector<1x1xf32>
    %45 = vector.broadcast %44 : vector<1x1xf32> to vector<1x128xf32>
    %c0_20 = arith.constant 0 : index
    %c0_21 = arith.constant 0 : index
    %c0_22 = arith.constant 0 : index
    %46 = vector.load %arg8[%c0_20, %c0_21, %c0_22] : memref<1x1x128xf32, #tpu.memory_space<vmem>>, vector<1x1x128xf32>
    %47 = vector.shape_cast %46 : vector<1x1x128xf32> to vector<1x128xf32>
    %48 = vector.shape_cast %45 : vector<1x128xf32> to vector<1x1x128xf32>
    tpu.vector_store %arg8[%c0_20, %c0_21, %c0_22], %48 {strides = array<i32>} : memref<1x1x128xf32, #tpu.memory_space<vmem>>, vector<1x1x128xf32>,
    return
  }
  func.func @transform_0(%arg0: i32) -> (i32, i32, i32) {
    %c0_i32 = arith.constant 0 : i32
    %c0_i32_0 = arith.constant 0 : i32
    %c0_i32_1 = arith.constant 0 : i32
    return %arg0, %c0_i32, %c0_i32_0 : i32, i32, i32
  }
  func.func @transform_1(%arg0: i32) -> (i32, i32) {
    %c0_i32 = arith.constant 0 : i32
    %c0_i32_0 = arith.constant 0 : i32
    %c0_i32_1 = arith.constant 0 : i32
    return %c0_i32, %c0_i32_0 : i32, i32
  }
  func.func @transform_2(%arg0: i32) -> (i32, i32) {
    %c0_i32 = arith.constant 0 : i32
    %c0_i32_0 = arith.constant 0 : i32
    %c0_i32_1 = arith.constant 0 : i32
    return %c0_i32, %c0_i32_0 : i32, i32
  }
  func.func @transform_3(%arg0: i32) -> (i32, i32) {
    %c0_i32 = arith.constant 0 : i32
    %c0_i32_0 = arith.constant 0 : i32
    %c0_i32_1 = arith.constant 0 : i32
    return %c0_i32, %c0_i32_0 : i32, i32
  }
  func.func @transform_4(%arg0: i32) -> (i32, i32) {
    %c0_i32 = arith.constant 0 : i32
    %c0_i32_0 = arith.constant 0 : i32
    %c0_i32_1 = arith.constant 0 : i32
    return %c0_i32, %c0_i32_0 : i32, i32
  }
  func.func @transform_5(%arg0: i32) -> (i32, i32) {
    %c0_i32 = arith.constant 0 : i32
    %c0_i32_0 = arith.constant 0 : i32
    %c0_i32_1 = arith.constant 0 : i32
    return %c0_i32, %c0_i32_0 : i32, i32
  }
  func.func @transform_6(%arg0: i32) -> (i32, i32) {
    %c0_i32 = arith.constant 0 : i32
    %c0_i32_0 = arith.constant 0 : i32
    %c0_i32_1 = arith.constant 0 : i32
    return %c0_i32, %c0_i32_0 : i32, i32
  }
  func.func @transform_7(%arg0: i32) -> (i32, i32, i32) {
    %c0_i32 = arith.constant 0 : i32
    %c0_i32_0 = arith.constant 0 : i32
    %c0_i32_1 = arith.constant 0 : i32
    return %arg0, %c0_i32, %c0_i32_0 : i32, i32, i32
  }
}

</mosaic_0001>

<llo_original>
// kernel: cnn_forward.1
$region0: #{cnn_forward.1}
  #allocation0 [shape = 'u32[]', space=smem, size = 0x4, offset = 0x4, fixed_abs, tag = 'smem constant byte address 0x4 - core index']
  #allocation1 [shape = 'u32[144,128]{1,0:T(1,128)}', space=vmem, size = 0x12000, scoped, tag = 'internal scratch']
  #allocation2 [shape = 'f32[1,1]{1,0:T(1,128)S(1)}', space=vmem, size = 0x200, scoped, tag = 'scoped memory for cnn_forward.1']
  %s0 = inlined_call_operand.hbm [shape: f32[2,4,32], index: 0, kind: input, shape index: {}]
  %s1 = inlined_call_operand.hbm [shape: f32[4,384], index: 1, kind: input, shape index: {}]
  %s2 = inlined_call_operand.vmem [shape: f32[1,128], index: 2, kind: input, shape index: {}]
  %s3 = inlined_call_operand.hbm [shape: f32[128,384], index: 3, kind: input, shape index: {}]
  %s4 = inlined_call_operand.vmem [shape: f32[1,128], index: 4, kind: input, shape index: {}]
  %s5 = inlined_call_operand.vmem [shape: f32[1,128], index: 5, kind: input, shape index: {}]
  %s6 = inlined_call_operand.<no memory space> [shape: f32[1,1], index: 6, kind: input, shape index: {}]
  %s7 = inlined_call_operand.vmem [shape: f32[2,1,128], index: 7, kind: output, shape index: {}]
  %s8 = sld [smem:[#allocation0]]
  $region73: #{cnn_forward.1} parent=0
    _
  %s10 = ssub.s32 1, %s8
  %s11 = scalar_select 0, %s10, %s8
  %v12 = vstv %s6
  %13 = vst [vmem:[#allocation2] sm:$0x1] %v12
  $region1: #{cnn_forward.1} parent=0
    #allocation3 [shape = 'u8[4096]{0}', space=vmem, size = 0x1000, scoped, tag = 'input window, operand 0']
    #allocation4 [shape = 's32[2]{0}', space=sflag, size = 0x8, scoped, tag = 'scoped memory for cnn_forward.1']
    #allocation5 [shape = 'u8[6144]{0}', space=vmem, size = 0x1800, scoped, tag = 'input window, operand 1, single buffered']
    #allocation6 [shape = 's32[1]{0}', space=sflag, size = 0x4, scoped, tag = 'scoped memory for cnn_forward.1']
    #allocation7 [shape = 'u8[196608]{0}', space=vmem, size = 0x30000, scoped, tag = 'input window, operand 3, single buffered']
    %14 = vsyncpa [#allocation4], 0
    %s15 = scalar_lea.sflag [#allocation4], 1
    %16 = vsyncpa %s15, 0
    %17 = vsyncpa [#allocation6], 0
    loop: start=0, step=1, limit=4
    $region2: #{cnn_forward.1} parent=1 // loop_pre_header
      _
    $region3: #{cnn_forward.1} parent=1 // loop_header
      %s19 = sphi 0, %s23
      %p20 = scmp.ge.s32.totalorder %s19, 4
      %s29 = sphi 0, %s31
      %s32 = sphi 0, %s29
      %s33 = sphi 0, %s32
      %s49 = sphi 0, %s33
      %s53 = sphi 0, %s53
      %s55 = sphi 0, %s53
      %s56 = sphi 0, %s55
      %s70 = sphi 0, %s56
      %s74 = sphi 0, %s74
      %s76 = sphi 0, %s74
      %s77 = sphi 0, %s76
      %s91 = sphi 0, %s77
      %s95 = sphi 0, %s95
      %s97 = sphi 0, %s95
      %s98 = sphi 0, %s97
      %s112 = sphi 0, %s98
      %s116 = sphi 0, %s116
      %s118 = sphi 0, %s116
      %s119 = sphi 0, %s118
      %s133 = sphi 0, %s119
      %s137 = sphi 0, %s137
      %s139 = sphi 0, %s137
      %s140 = sphi 0, %s139
      %s154 = sphi 0, %s140
      %s158 = sphi 0, %s158
      %s160 = sphi 0, %s158
      %s161 = sphi 0, %s160
      %s175 = sphi 0, %s161
      %s181 = sphi 0, %s183
      %s184 = sphi 0, %s181
      %s185 = sphi 0, %s184
      %s201 = sphi 0, %s185
    $region4: #{cnn_forward.1} parent=1 // loop_header_branch
      %22 = sbr.rel (%p20) target = $region8
    $region5: #{cnn_forward.1} parent=1 // loop_body
      %s24 = ssub.s32 %s19, 1
      %s25 = ssub.s32 %s19, 2
      %s26 = sadd.s32 %s19, 1
      %s27 = ssub.s32 %s19, %s26
      %p28 = scmp.eq.s32.totalorder %s27, 0
      %s30 = sadd.s32 %s29, 1
      %s31 = scalar_select %p28, %s29, %s30
      %p34 = pneg %p28
      %p35 = scmp.eq.s32.totalorder %s19, 1
      %p36 = por %p34, %p35
      %p37 = scmp.ne.s32.totalorder %s29, %s32
      %p38 = scmp.eq.s32.totalorder %s19, 0
      %p39 = por %p37, %p38
      %p40 = scmp.ne.s32.totalorder %s29, %s32
      %p41 = scmp.eq.s32.totalorder %s24, 1
      %p42 = por %p40, %p41
      %p43 = scmp.ne.s32.totalorder %s32, %s33
      %p44 = scmp.eq.s32.totalorder %s24, 0
      %p45 = por %p43, %p44
      %p46 = scmp.ne.s32.totalorder %s32, %s33
      %p47 = scmp.eq.s32.totalorder %s25, 1
      %p48 = por %p46, %p47
      %p50 = scmp.ne.s32.totalorder %s33, %s49
      %p51 = scmp.eq.s32.totalorder %s25, 0
      %p52 = por %p50, %p51
      %s54 = sadd.s32 %s53, 1
      %p57 = scmp.eq.s32.totalorder %s19, 1
      %p58 = scmp.ne.s32.totalorder %s53, %s55
      %p59 = scmp.eq.s32.totalorder %s19, 0
      %p60 = por %p58, %p59
      %p61 = scmp.ne.s32.totalorder %s53, %s55
      %p62 = scmp.eq.s32.totalorder %s24, 1
      %p63 = por %p61, %p62
      %p64 = scmp.ne.s32.totalorder %s55, %s56
      %p65 = scmp.eq.s32.totalorder %s24, 0
      %p66 = por %p64, %p65
      %p67 = scmp.ne.s32.totalorder %s55, %s56
      %p68 = scmp.eq.s32.totalorder %s25, 1
      %p69 = por %p67, %p68
      %p71 = scmp.ne.s32.totalorder %s56, %s70
      %p72 = scmp.eq.s32.totalorder %s25, 0
      %p73 = por %p71, %p72
      %s75 = sadd.s32 %s74, 1
      %p78 = scmp.eq.s32.totalorder %s19, 1
      %p79 = scmp.ne.s32.totalorder %s74, %s76
      %p80 = scmp.eq.s32.totalorder %s19, 0
      %p81 = por %p79, %p80
      %p82 = scmp.ne.s32.totalorder %s74, %s76
      %p83 = scmp.eq.s32.totalorder %s24, 1
      %p84 = por %p82, %p83
      %p85 = scmp.ne.s32.totalorder %s76, %s77
      %p86 = scmp.eq.s32.totalorder %s24, 0
      %p87 = por %p85, %p86
      %p88 = scmp.ne.s32.totalorder %s76, %s77
      %p89 = scmp.eq.s32.totalorder %s25, 1
      %p90 = por %p88, %p89
      %p92 = scmp.ne.s32.totalorder %s77, %s91
      %p93 = scmp.eq.s32.totalorder %s25, 0
      %p94 = por %p92, %p93
      %s96 = sadd.s32 %s95, 1
      %p99 = scmp.eq.s32.totalorder %s19, 1
      %p100 = scmp.ne.s32.totalorder %s95, %s97
      %p101 = scmp.eq.s32.totalorder %s19, 0
      %p102 = por %p100, %p101
      %p103 = scmp.ne.s32.totalorder %s95, %s97
      %p104 = scmp.eq.s32.totalorder %s24, 1
      %p105 = por %p103, %p104
      %p106 = scmp.ne.s32.totalorder %s97, %s98
      %p107 = scmp.eq.s32.totalorder %s24, 0
      %p108 = por %p106, %p107
      %p109 = scmp.ne.s32.totalorder %s97, %s98
      %p110 = scmp.eq.s32.totalorder %s25, 1
      %p111 = por %p109, %p110
      %p113 = scmp.ne.s32.totalorder %s98, %s112
      %p114 = scmp.eq.s32.totalorder %s25, 0
      %p115 = por %p113, %p114
      %s117 = sadd.s32 %s116, 1
      %p120 = scmp.eq.s32.totalorder %s19, 1
      %p121 = scmp.ne.s32.totalorder %s116, %s118
      %p122 = scmp.eq.s32.totalorder %s19, 0
      %p123 = por %p121, %p122
      %p124 = scmp.ne.s32.totalorder %s116, %s118
      %p125 = scmp.eq.s32.totalorder %s24, 1
      %p126 = por %p124, %p125
      %p127 = scmp.ne.s32.totalorder %s118, %s119
      %p128 = scmp.eq.s32.totalorder %s24, 0
      %p129 = por %p127, %p128
      %p130 = scmp.ne.s32.totalorder %s118, %s119
      %p131 = scmp.eq.s32.totalorder %s25, 1
      %p132 = por %p130, %p131
      %p134 = scmp.ne.s32.totalorder %s119, %s133
      %p135 = scmp.eq.s32.totalorder %s25, 0
      %p136 = por %p134, %p135
      %s138 = sadd.s32 %s137, 1
      %p141 = scmp.eq.s32.totalorder %s19, 1
      %p142 = scmp.ne.s32.totalorder %s137, %s139
      %p143 = scmp.eq.s32.totalorder %s19, 0
      %p144 = por %p142, %p143
      %p145 = scmp.ne.s32.totalorder %s137, %s139
      %p146 = scmp.eq.s32.totalorder %s24, 1
      %p147 = por %p145, %p146
      %p148 = scmp.ne.s32.totalorder %s139, %s140
      %p149 = scmp.eq.s32.totalorder %s24, 0
      %p150 = por %p148, %p149
      %p151 = scmp.ne.s32.totalorder %s139, %s140
      %p152 = scmp.eq.s32.totalorder %s25, 1
      %p153 = por %p151, %p152
      %p155 = scmp.ne.s32.totalorder %s140, %s154
      %p156 = scmp.eq.s32.totalorder %s25, 0
      %p157 = por %p155, %p156
      %s159 = sadd.s32 %s158, 1
      %p162 = scmp.eq.s32.totalorder %s19, 1
      %p163 = scmp.ne.s32.totalorder %s158, %s160
      %p164 = scmp.eq.s32.totalorder %s19, 0
      %p165 = por %p163, %p164
      %p166 = scmp.ne.s32.totalorder %s158, %s160
      %p167 = scmp.eq.s32.totalorder %s24, 1
      %p168 = por %p166, %p167
      %p169 = scmp.ne.s32.totalorder %s160, %s161
      %p170 = scmp.eq.s32.totalorder %s24, 0
      %p171 = por %p169, %p170
      %p172 = scmp.ne.s32.totalorder %s160, %s161
      %p173 = scmp.eq.s32.totalorder %s25, 1
      %p174 = por %p172, %p173
      %p176 = scmp.ne.s32.totalorder %s161, %s175
      %p177 = scmp.eq.s32.totalorder %s25, 0
      %p178 = por %p176, %p177
      %s179 = ssub.s32 %s19, %s26
      %p180 = scmp.eq.s32.totalorder %s179, 0
      %s182 = sadd.s32 %s181, 1
      %s183 = scalar_select %p180, %s181, %s182
      %p186 = pneg %p180
      %p187 = scmp.eq.s32.totalorder %s19, 1
      %p188 = por %p186, %p187
      %p189 = scmp.ne.s32.totalorder %s181, %s184
      %p190 = scmp.eq.s32.totalorder %s19, 0
      %p191 = por %p189, %p190
      %p192 = scmp.ne.s32.totalorder %s181, %s184
      %p193 = scmp.eq.s32.totalorder %s24, 1
      %p194 = por %p192, %p193
      %p195 = scmp.ne.s32.totalorder %s184, %s185
      %p196 = scmp.eq.s32.totalorder %s24, 0
      %p197 = por %p195, %p196
      %p198 = scmp.ne.s32.totalorder %s184, %s185
      %p199 = scmp.eq.s32.totalorder %s25, 1
      %p200 = por %p198, %p199
      %p202 = scmp.ne.s32.totalorder %s185, %s201
      %p203 = scmp.eq.s32.totalorder %s25, 0
      %p204 = por %p202, %p203
      %p205 = scmp.le.s32.totalorder 1, %s19
      %p206 = scmp.lt.s32.totalorder %s19, 3
      %p207 = pnand %p205, %p206
      %p208 = pneg %p207
      // Predicated region
      $region9: #{cnn_forward.1} parent=5 // pred_check
        _
      $region10: #{cnn_forward.1} parent=5 // pred_check_branch
        %210 = sbr.rel (%p207) target = $region12
      $region11: #{cnn_forward.1} parent=5 // pred_region
        %s211 = ssub.s32 %s19, 1
        // Predicated region
        $region13: #{cnn_forward.1} parent=11 // pred_check
          %p212 = pneg %p66
        $region14: #{cnn_forward.1} parent=11 // pred_check_branch
          %214 = sbr.rel (%p212) target = $region16
        $region15: #{cnn_forward.1} parent=11 // pred_region
          %s216 = ssub.s32 192, 192
          %217 = vsyncadd [#allocation6], %s216
          %s219 = sshll.u32 [#allocation5], 4
          %s220 = int_to_ptr.vmem [resolvable:$true] %s219
          %222 = dma.hbm_to_vmem [thread:$0]  %s1, 192, %s220, [#allocation6]
        $region16: #{cnn_forward.1} parent=11 // pred_fallthru
          _
        // Predicated region
        $region17: #{cnn_forward.1} parent=11 // pred_check
          %p223 = pneg %p87
        $region18: #{cnn_forward.1} parent=11 // pred_check_branch
          %225 = sbr.rel (%p223) target = $region20
        $region19: #{cnn_forward.1} parent=11 // pred_region
          _
        $region20: #{cnn_forward.1} parent=11 // pred_fallthru
          _
        // Predicated region
        $region21: #{cnn_forward.1} parent=11 // pred_check
          %p226 = pneg %p108
        $region22: #{cnn_forward.1} parent=11 // pred_check_branch
          %228 = sbr.rel (%p226) target = $region24
        $region23: #{cnn_forward.1} parent=11 // pred_region
          %s230 = ssub.s32 6144, 6144
          %231 = vsyncadd [#allocation6], %s230
          %s232 = sshll.u32 [#allocation7], 4
          %s233 = int_to_ptr.vmem [resolvable:$true] %s232
          %238 = dma.hbm_to_vmem [thread:$0]  %s3, 6144, %s233, [#allocation6], 384, 384, 24
        $region24: #{cnn_forward.1} parent=11 // pred_fallthru
          _
        // Predicated region
        $region25: #{cnn_forward.1} parent=11 // pred_check
          %p239 = pneg %p129
        $region26: #{cnn_forward.1} parent=11 // pred_check_branch
          %241 = sbr.rel (%p239) target = $region28
        $region27: #{cnn_forward.1} parent=11 // pred_region
          _
        $region28: #{cnn_forward.1} parent=11 // pred_fallthru
          _
        // Predicated region
        $region29: #{cnn_forward.1} parent=11 // pred_check
          %p242 = pneg %p150
        $region30: #{cnn_forward.1} parent=11 // pred_check_branch
          %244 = sbr.rel (%p242) target = $region32
        $region31: #{cnn_forward.1} parent=11 // pred_region
          _
        $region32: #{cnn_forward.1} parent=11 // pred_fallthru
          _
        // Predicated region
        $region33: #{cnn_forward.1} parent=11 // pred_check
          %p245 = pneg %p171
        $region34: #{cnn_forward.1} parent=11 // pred_check_branch
          %247 = sbr.rel (%p245) target = $region36
        $region35: #{cnn_forward.1} parent=11 // pred_region
          _
        $region36: #{cnn_forward.1} parent=11 // pred_fallthru
          _
      $region12: #{cnn_forward.1} parent=5 // pred_fallthru
        _
      %p248 = scmp.lt.s32.totalorder %s19, 2
      // Predicated region
      $region37: #{cnn_forward.1} parent=5 // pred_check
        %p249 = pneg %p248
      $region38: #{cnn_forward.1} parent=5 // pred_check_branch
        %251 = sbr.rel (%p249) target = $region40
      $region39: #{cnn_forward.1} parent=5 // pred_region
        // Predicated region
        $region41: #{cnn_forward.1} parent=39 // pred_check
          %p252 = pneg %p39
        $region42: #{cnn_forward.1} parent=39 // pred_check_branch
          %254 = sbr.rel (%p252) target = $region44
        $region43: #{cnn_forward.1} parent=39 // pred_region
          %s255 = sand.u32 %s29, 1
          %s256 = scalar_lea.sflag [#allocation4], %s255
          %s257 = sand.u32 %s29, 1
          %s258 = smul.addr %s257, 4
          %s259 = scalar_lea.vmem [#allocation3], %s258
          %s261 = ssub.s32 64, 64
          %262 = vsyncadd %s256, %s261
          %s263 = smul.addr %s19, 64
          %s264 = scalar_lea.hbm %s0, %s263
          %s266 = sshll.u32 %s259, 4
          %s267 = int_to_ptr.vmem [resolvable:$true] %s266
          %269 = dma.hbm_to_vmem [thread:$0]  %s264, 64, %s267, %s256
        $region44: #{cnn_forward.1} parent=39 // pred_fallthru
          _
      $region40: #{cnn_forward.1} parent=5 // pred_fallthru
        _
      %p270 = scmp.le.s32.totalorder 1, %s19
      %p271 = scmp.lt.s32.totalorder %s19, 3
      %p272 = pnand %p270, %p271
      %p273 = pneg %p272
      // Predicated region
      $region45: #{cnn_forward.1} parent=5 // pred_check
        _
      $region46: #{cnn_forward.1} parent=5 // pred_check_branch
        %275 = sbr.rel (%p272) target = $region48
      $region47: #{cnn_forward.1} parent=5 // pred_region
        %s276 = ssub.s32 %s19, 1
        %s277 = sand.u32 %s32, 1
        %s278 = scalar_lea.sflag [#allocation4], %s277
        %s279 = sand.u32 %s32, 1
        %s280 = smul.addr %s279, 4
        %s281 = scalar_lea.vmem [#allocation3], %s280
        // Predicated region
        $region49: #{cnn_forward.1} parent=47 // pred_check
          %p282 = pneg %p45
        $region50: #{cnn_forward.1} parent=47 // pred_check_branch
          %284 = sbr.rel (%p282) target = $region52
        $region51: #{cnn_forward.1} parent=47 // pred_region
          %285 = dma.done %s278, 64
        $region52: #{cnn_forward.1} parent=47 // pred_fallthru
          _
        // Predicated region
        $region53: #{cnn_forward.1} parent=47 // pred_check
          %p286 = pneg %p66
        $region54: #{cnn_forward.1} parent=47 // pred_check_branch
          %288 = sbr.rel (%p286) target = $region56
        $region55: #{cnn_forward.1} parent=47 // pred_region
          %289 = dma.done [#allocation6], 192
        $region56: #{cnn_forward.1} parent=47 // pred_fallthru
          _
        // Predicated region
        $region57: #{cnn_forward.1} parent=47 // pred_check
          %p290 = pneg %p108
        $region58: #{cnn_forward.1} parent=47 // pred_check_branch
          %292 = sbr.rel (%p290) target = $region60
        $region59: #{cnn_forward.1} parent=47 // pred_region
          %293 = dma.done [#allocation6], 6144
        $region60: #{cnn_forward.1} parent=47 // pred_fallthru
          _
        %s294 = sand.u32 %s32, 1
        %s295 = scalar_lea.sflag [#allocation4], %s294
        %s296 = sand.u32 %s32, 1
        %s297 = smul.addr %s296, 4
        %s298 = scalar_lea.vmem [#allocation3], %s297
        %p299 = pneg %p45
        %p300 = pneg %p42
        %p301 = pneg %p66
        %p302 = pneg %p63
        %p303 = pneg %p87
        %p304 = pneg %p84
        %p305 = pneg %p108
        %p306 = pneg %p105
        %p307 = pneg %p129
        %p308 = pneg %p126
        %p309 = pneg %p150
        %p310 = pneg %p147
        %p311 = pneg %p171
        %p312 = pneg %p168
        %p313 = pneg %p197
        %p314 = pneg %p194
        %p315 = scmp.lt.s32.totalorder %s24, 1
        %s316 = scalar_select %p315, %s24, 1
        %s317 = scalar_lea.vmem %s7, %s316
        %p318 = scmp.lt.s32.totalorder %s24, 1
        %s319 = scalar_select %p318, %s24, 1
        %s320 = scalar_lea.vmem %s7, %s319
        %v321 = vld [vmem:[%s281] sm:$0xf]
        %v322 = vld [vmem:[#allocation5] sm:$0xff]
        %v323 = vld [vmem:[#allocation5 + $0x8] sm:$0xf]
        %v324 = vld [vmem:[%s2] sm:$0x1]
        %325 = vxpose.xlu0.b32.start [1/16] %v321, 128
        %326 = vxpose.xlu0.b32.cont [2/16] 0.0, 128
        %327 = vxpose.xlu0.b32.cont [3/16] 0.0, 128
        %328 = vxpose.xlu0.b32.cont [4/16] 0.0, 128
        %329 = vxpose.xlu0.b32.cont [5/16] 0.0, 128
        %330 = vxpose.xlu0.b32.cont [6/16] 0.0, 128
        %331 = vxpose.xlu0.b32.cont [7/16] 0.0, 128
        %332 = vxpose.xlu0.b32.cont [8/16] 0.0, 128
        %333 = vxpose.xlu0.b32.cont [9/16] 0.0, 128
        %334 = vxpose.xlu0.b32.cont [10/16] 0.0, 128
        %335 = vxpose.xlu0.b32.cont [11/16] 0.0, 128
        %336 = vxpose.xlu0.b32.cont [12/16] 0.0, 128
        %337 = vxpose.xlu0.b32.cont [13/16] 0.0, 128
        %338 = vxpose.xlu0.b32.cont [14/16] 0.0, 128
        %339 = vxpose.xlu0.b32.cont [15/16] 0.0, 128
        %340 = vxpose.xlu0.b32.end [16/16] 0.0, 128
        %v341 = vpop.trf.xlu0
        %v342 = vpop.trf.xlu0
        %v343 = vpop.trf.xlu0
        %v344 = vpop.trf.xlu0
        %v345 = vpop.trf.xlu0
        %v346 = vpop.trf.xlu0
        %v347 = vpop.trf.xlu0
        %v348 = vpop.trf.xlu0
        %v349 = vpop.trf.xlu0
        %v350 = vpop.trf.xlu0
        %v351 = vpop.trf.xlu0
        %v352 = vpop.trf.xlu0
        %v353 = vpop.trf.xlu0
        %v354 = vpop.trf.xlu0
        %v355 = vpop.trf.xlu0
        %v356 = vpop.trf.xlu0
        %v359 = vcombine.high %v322, %v322
        %vm360 = vcmask 31744
        %v362 = vsel %vm360, %v341, 0
        %v365 = vsel %vm360, %v342, 0
        %v368 = vsel %vm360, %v343, 0
        %v371 = vsel %vm360, %v344, 0
        %vm373 = vcmask 1043456
        %v374 = vsel %vm373, %v322, 0
        %v376 = vsel %vm373, %v359, 0
        %v378 = vsel %vm373, %v323, 0
        %380 = vmatprep.subr.mxu0 %v376
        %381 = vmatpush1.msra.mxu0 %v374
        %382 = vmatprep.subr.mxu0 0.0
        %383 = vmatpush1.msra.mxu0 0.0
        %384 = vmatprep.subr.mxu0 0.0
        %385 = vmatpush1.msra.mxu0 0.0
        %386 = vmatprep.subr.mxu0 0.0
        %387 = vmatpush1.msra.mxu0 0.0
        %388 = vmatprep.subr.mxu0 0.0
        %389 = vmatpush1.msra.mxu0 0.0
        %390 = vmatprep.subr.mxu0 0.0
        %391 = vmatpush1.msra.mxu0 0.0
        %392 = vmatprep.subr.mxu0 0.0
        %393 = vmatpush1.msra.mxu0 0.0
        %394 = vmatprep.subr.mxu0 0.0
        %395 = vmatpush1.msra.mxu0 0.0
        %396 = vmatprep.subr.mxu0 0.0
        %397 = vmatpush1.msra.mxu0 0.0
        %398 = vmatprep.subr.mxu0 0.0
        %399 = vmatpush1.msra.mxu0 0.0
        %400 = vmatprep.subr.mxu0 0.0
        %401 = vmatpush1.msra.mxu0 0.0
        %402 = vmatprep.subr.mxu0 0.0
        %403 = vmatpush1.msra.mxu0 0.0
        %404 = vmatprep.subr.mxu0 0.0
        %405 = vmatpush1.msra.mxu0 0.0
        %406 = vmatprep.subr.mxu0 0.0
        %407 = vmatpush1.msra.mxu0 0.0
        %408 = vmatprep.subr.mxu0 0.0
        %409 = vmatpush1.msra.mxu0 0.0
        %410 = vmatprep.subr.mxu0 0.0
        %411 = vmatpush1.msra.mxu0 0.0
        %412 = vmatprep.subr.mxu0 0.0
        %413 = vmatpush1.msra.mxu0 0.0
        %414 = vmatprep.subr.mxu0 0.0
        %415 = vmatpush1.msra.mxu0 0.0
        %416 = vmatprep.subr.mxu0 0.0
        %417 = vmatpush1.msra.mxu0 0.0
        %418 = vmatprep.subr.mxu0 0.0
        %419 = vmatpush1.msra.mxu0 0.0
        %420 = vmatprep.subr.mxu0 0.0
        %421 = vmatpush1.msra.mxu0 0.0
        %422 = vmatprep.subr.mxu0 0.0
        %423 = vmatpush1.msra.mxu0 0.0
        %424 = vmatprep.subr.mxu0 0.0
        %425 = vmatpush1.msra.mxu0 0.0
        %426 = vmatprep.subr.mxu0 0.0
        %427 = vmatpush1.msra.mxu0 0.0
        %428 = vmatprep.subr.mxu0 0.0
        %429 = vmatpush1.msra.mxu0 0.0
        %430 = vmatprep.subr.mxu0 0.0
        %431 = vmatpush1.msra.mxu0 0.0
        %432 = vmatprep.subr.mxu0 0.0
        %433 = vmatpush1.msra.mxu0 0.0
        %434 = vmatprep.subr.mxu0 0.0
        %435 = vmatpush1.msra.mxu0 0.0
        %436 = vmatprep.subr.mxu0 0.0
        %437 = vmatpush1.msra.mxu0 0.0
        %438 = vmatprep.subr.mxu0 0.0
        %439 = vmatpush1.msra.mxu0 0.0
        %440 = vmatprep.subr.mxu0 0.0
        %441 = vmatpush1.msra.mxu0 0.0
        %442 = vmatprep.subr.mxu0 0.0
        %443 = vmatpush1.msra.mxu0 0.0
        %444 = vmatprep.mubr.f32.mxu0 0.0
        %445 = vmatmul.mubr.f32.gmra.mrb[0].mxu0 %v362
        %v446 = vpop.f32.mrb[0].mxu0
        %v447 = vadd.f32 0.0, %v446
        %v448 = vpop.f32.mrb[0].mxu0
        %v449 = vadd.f32 0.0, %v448
        %450 = vmatprep.mubr.f32.mxu0 0.0
        %451 = vmatmul.mubr.f32.gmra.mrb[0].mxu0 %v365
        %v452 = vpop.f32.mrb[0].mxu0
        %v453 = vadd.f32 0.0, %v452
        %v454 = vpop.f32.mrb[0].mxu0
        %v455 = vadd.f32 0.0, %v454
        %456 = vmatprep.mubr.f32.mxu0 0.0
        %457 = vmatmul.mubr.f32.gmra.mrb[0].mxu0 %v368
        %v458 = vpop.f32.mrb[0].mxu0
        %v459 = vadd.f32 0.0, %v458
        %v460 = vpop.f32.mrb[0].mxu0
        %v461 = vadd.f32 0.0, %v460
        %462 = vmatprep.mubr.f32.mxu0 0.0
        %463 = vmatmul.mubr.f32.gmra.mrb[0].mxu0 %v371
        %v464 = vpop.f32.mrb[0].mxu0
        %v465 = vadd.f32 0.0, %v464
        %v466 = vpop.f32.mrb[0].mxu0
        %v467 = vadd.f32 0.0, %v466
        %468 = vdwg.mxu0
        %469 = vmatprep.subr.mxu0 0.0
        %470 = vmatpush1.msra.mxu0 %v378
        %471 = vmatprep.subr.mxu0 0.0
        %472 = vmatpush1.msra.mxu0 0.0
        %473 = vmatprep.subr.mxu0 0.0
        %474 = vmatpush1.msra.mxu0 0.0
        %475 = vmatprep.subr.mxu0 0.0
        %476 = vmatpush1.msra.mxu0 0.0
        %477 = vmatprep.subr.mxu0 0.0
        %478 = vmatpush1.msra.mxu0 0.0
        %479 = vmatprep.subr.mxu0 0.0
        %480 = vmatpush1.msra.mxu0 0.0
        %481 = vmatprep.subr.mxu0 0.0
        %482 = vmatpush1.msra.mxu0 0.0
        %483 = vmatprep.subr.mxu0 0.0
        %484 = vmatpush1.msra.mxu0 0.0
        %485 = vmatprep.subr.mxu0 0.0
        %486 = vmatpush1.msra.mxu0 0.0
        %487 = vmatprep.subr.mxu0 0.0
        %488 = vmatpush1.msra.mxu0 0.0
        %489 = vmatprep.subr.mxu0 0.0
        %490 = vmatpush1.msra.mxu0 0.0
        %491 = vmatprep.subr.mxu0 0.0
        %492 = vmatpush1.msra.mxu0 0.0
        %493 = vmatprep.subr.mxu0 0.0
        %494 = vmatpush1.msra.mxu0 0.0
        %495 = vmatprep.subr.mxu0 0.0
        %496 = vmatpush1.msra.mxu0 0.0
        %497 = vmatprep.subr.mxu0 0.0
        %498 = vmatpush1.msra.mxu0 0.0
        %499 = vmatprep.subr.mxu0 0.0
        %500 = vmatpush1.msra.mxu0 0.0
        %501 = vmatprep.subr.mxu0 0.0
        %502 = vmatpush1.msra.mxu0 0.0
        %503 = vmatprep.subr.mxu0 0.0
        %504 = vmatpush1.msra.mxu0 0.0
        %505 = vmatprep.subr.mxu0 0.0
        %506 = vmatpush1.msra.mxu0 0.0
        %507 = vmatprep.subr.mxu0 0.0
        %508 = vmatpush1.msra.mxu0 0.0
        %509 = vmatprep.subr.mxu0 0.0
        %510 = vmatpush1.msra.mxu0 0.0
        %511 = vmatprep.subr.mxu0 0.0
        %512 = vmatpush1.msra.mxu0 0.0
        %513 = vmatprep.subr.mxu0 0.0
        %514 = vmatpush1.msra.mxu0 0.0
        %515 = vmatprep.subr.mxu0 0.0
        %516 = vmatpush1.msra.mxu0 0.0
        %517 = vmatprep.subr.mxu0 0.0
        %518 = vmatpush1.msra.mxu0 0.0
        %519 = vmatprep.subr.mxu0 0.0
        %520 = vmatpush1.msra.mxu0 0.0
        %521 = vmatprep.subr.mxu0 0.0
        %522 = vmatpush1.msra.mxu0 0.0
        %523 = vmatprep.subr.mxu0 0.0
        %524 = vmatpush1.msra.mxu0 0.0
        %525 = vmatprep.subr.mxu0 0.0
        %526 = vmatpush1.msra.mxu0 0.0
        %527 = vmatprep.subr.mxu0 0.0
        %528 = vmatpush1.msra.mxu0 0.0
        %529 = vmatprep.subr.mxu0 0.0
        %530 = vmatpush1.msra.mxu0 0.0
        %531 = vmatprep.subr.mxu0 0.0
        %532 = vmatpush1.msra.mxu0 0.0
        %533 = vmatprep.mubr.f32.mxu0 0.0
        %534 = vmatmul.mubr.f32.gmra.mrb[0].mxu0 %v362
        %v535 = vpop.f32.mrb[0].mxu0
        %v536 = vadd.f32 0.0, %v535
        %v537 = vpop.f32.mrb[0].mxu0
        %538 = vmatprep.mubr.f32.mxu0 0.0
        %539 = vmatmul.mubr.f32.gmra.mrb[0].mxu0 %v365
        %v540 = vpop.f32.mrb[0].mxu0
        %v541 = vadd.f32 0.0, %v540
        %v542 = vpop.f32.mrb[0].mxu0
        %543 = vmatprep.mubr.f32.mxu0 0.0
        %544 = vmatmul.mubr.f32.gmra.mrb[0].mxu0 %v368
        %v545 = vpop.f32.mrb[0].mxu0
        %v546 = vadd.f32 0.0, %v545
        %v547 = vpop.f32.mrb[0].mxu0
        %548 = vmatprep.mubr.f32.mxu0 0.0
        %549 = vmatmul.mubr.f32.gmra.mrb[0].mxu0 %v371
        %v550 = vpop.f32.mrb[0].mxu0
        %v551 = vadd.f32 0.0, %v550
        %v552 = vpop.f32.mrb[0].mxu0
        %553 = vdwg.mxu0
        %vm558 = vcmask 1046528
        %v559 = vrot.slane %v449, 1
        %v560 = vrot.slane %v455, 1
        %v561 = vsel %vm558, %v559, %v560
        %v562 = vrot.slane %v461, 1
        %v563 = vsel %vm558, %v560, %v562
        %v564 = vrot.slane %v467, 1
        %v565 = vsel %vm558, %v562, %v564
        %v570 = vadd.f32 %v447, %v561
        %v571 = vadd.f32 %v453, %v563
        %v572 = vadd.f32 %v459, %v565
        %v573 = vadd.f32 %v465, %v564
        %vm578 = vcmask 1045504
        %v579 = vrot.slane %v536, 2
        %v580 = vrot.slane %v541, 2
        %v581 = vsel %vm578, %v579, %v580
        %v582 = vrot.slane %v546, 2
        %v583 = vsel %vm578, %v580, %v582
        %v584 = vrot.slane %v551, 2
        %v585 = vsel %vm578, %v582, %v584
        %v590 = vadd.f32 %v570, %v581
        %v591 = vadd.f32 %v571, %v583
        %v592 = vadd.f32 %v572, %v585
        %v593 = vadd.f32 %v573, %v584
        %v595 = vlaneseq
        %v596 = vshrl.u32 %v595, 7
        %v597 = vsub.s32 0, %v596
        %v598 = vrot.slane %v324, %v597
        %v600 = vadd.f32 %v590, %v598
        %v601 = vadd.f32 %v591, %v598
        %v602 = vadd.f32 %v592, %v598
        %v603 = vadd.f32 %v593, %v598
        %v604 = vmax.f32 %v600, 0.0
        %v605 = vmax.f32 %v601, 0.0
        %v606 = vmax.f32 %v602, 0.0
        %v607 = vmax.f32 %v603, 0.0
        %v609 = vunpack.c.l.s4 1966171168
        %v610 = vunpack.c.0.s8 %v609
        %v611 = vlaneseq
        %v612 = vshrl.u32 %v611, 7
        %v613 = vsub.s32 %v610, %v612
        %v614 = vrot.slane %v604, %v613
        %v616 = vunpack.c.l.s4 1966171168
        %v617 = vunpack.c.0.s8 %v616
        %v618 = vlaneseq
        %v619 = vshrl.u32 %v618, 7
        %v620 = vsub.s32 %v617, %v619
        %v621 = vrot.slane %v605, %v620
        %v623 = vunpack.c.l.s4 1966171168
        %v624 = vunpack.c.0.s8 %v623
        %v625 = vlaneseq
        %v626 = vshrl.u32 %v625, 7
        %v627 = vsub.s32 %v624, %v626
        %v628 = vrot.slane %v606, %v627
        %v630 = vunpack.c.l.s4 1966171168
        %v631 = vunpack.c.0.s8 %v630
        %v632 = vlaneseq
        %v633 = vshrl.u32 %v632, 7
        %v634 = vsub.s32 %v631, %v633
        %v635 = vrot.slane %v607, %v634
        %v640 = vrot.slane %v614, 4
        %v641 = vrot.slane %v621, 4
        %v642 = vrot.slane %v628, 4
        %v643 = vrot.slane %v635, 4
        %v648 = vmax.f32 %v614, %v640
        %v649 = vmax.f32 %v621, %v641
        %v650 = vmax.f32 %v628, %v642
        %v651 = vmax.f32 %v635, %v643
        %v652 = vld [vmem:[#allocation7] sm:$0xff]
        %v653 = vld [vmem:[#allocation7 + $0x8] sm:$0xff]
        %v654 = vld [vmem:[#allocation7 + $0x10] sm:$0xff]
        %v655 = vld [vmem:[#allocation7 + $0x18] sm:$0xff]
        %v656 = vld [vmem:[#allocation7 + $0x20] sm:$0xff]
        %v657 = vld [vmem:[#allocation7 + $0x28] sm:$0xff]
        %v658 = vld [vmem:[#allocation7 + $0x30] sm:$0xff]
        %v659 = vld [vmem:[#allocation7 + $0x38] sm:$0xff]
        %v660 = vld [vmem:[#allocation7 + $0x40] sm:$0xff]
        %v661 = vld [vmem:[#allocation7 + $0x48] sm:$0xff]
        %v662 = vld [vmem:[#allocation7 + $0x50] sm:$0xff]
        %v663 = vld [vmem:[#allocation7 + $0x58] sm:$0xff]
        %v664 = vld [vmem:[#allocation7 + $0x60] sm:$0xff]
        %v665 = vld [vmem:[#allocation7 + $0x68] sm:$0xff]
        %v666 = vld [vmem:[#allocation7 + $0x70] sm:$0xff]
        %v667 = vld [vmem:[#allocation7 + $0x78] sm:$0xff]
        %v668 = vld [vmem:[#allocation7 + $0x80] sm:$0xff]
        %v669 = vld [vmem:[#allocation7 + $0x88] sm:$0xff]
        %v670 = vld [vmem:[#allocation7 + $0x90] sm:$0xff]
        %v671 = vld [vmem:[#allocation7 + $0x98] sm:$0xff]
        %v672 = vld [vmem:[#allocation7 + $0xa0] sm:$0xff]
        %v673 = vld [vmem:[#allocation7 + $0xa8] sm:$0xff]
        %v674 = vld [vmem:[#allocation7 + $0xb0] sm:$0xff]
        %v675 = vld [vmem:[#allocation7 + $0xb8] sm:$0xff]
        %v676 = vld [vmem:[#allocation7 + $0xc0] sm:$0xff]
        %v677 = vld [vmem:[#allocation7 + $0xc8] sm:$0xff]
        %v678 = vld [vmem:[#allocation7 + $0xd0] sm:$0xff]
        %v679 = vld [vmem:[#allocation7 + $0xd8] sm:$0xff]
        %v680 = vld [vmem:[#allocation7 + $0xe0] sm:$0xff]
        %v681 = vld [vmem:[#allocation7 + $0xe8] sm:$0xff]
        %v682 = vld [vmem:[#allocation7 + $0xf0] sm:$0xff]
        %v683 = vld [vmem:[#allocation7 + $0xf8] sm:$0xff]
        %v684 = vld [vmem:[#allocation7 + $0x100] sm:$0xff]
        %v685 = vld [vmem:[#allocation7 + $0x108] sm:$0xff]
        %v686 = vld [vmem:[#allocation7 + $0x110] sm:$0xff]
        %v687 = vld [vmem:[#allocation7 + $0x118] sm:$0xff]
        %v688 = vld [vmem:[#allocation7 + $0x120] sm:$0xff]
        %v689 = vld [vmem:[#allocation7 + $0x128] sm:$0xff]
        %v690 = vld [vmem:[#allocation7 + $0x130] sm:$0xff]
        %v691 = vld [vmem:[#allocation7 + $0x138] sm:$0xff]
        %v692 = vld [vmem:[#allocation7 + $0x140] sm:$0xff]
        %v693 = vld [vmem:[#allocation7 + $0x148] sm:$0xff]
        %v694 = vld [vmem:[#allocation7 + $0x150] sm:$0xff]
        %v695 = vld [vmem:[#allocation7 + $0x158] sm:$0xff]
        %v696 = vld [vmem:[#allocation7 + $0x160] sm:$0xff]
        %v697 = vld [vmem:[#allocation7 + $0x168] sm:$0xff]
        %v698 = vld [vmem:[#allocation7 + $0x170] sm:$0xff]
        %v699 = vld [vmem:[#allocation7 + $0x178] sm:$0xff]
        %v700 = vld [vmem:[%s4] sm:$0x1]
        %v705 = vcombine.low %v648, %v649
        %v706 = vcombine.low %v650, %v651
        %709 = vmatprep.subr.mxu0 %v653
        %710 = vmatpush1.msra.mxu0 %v652
        %711 = vmatprep.subr.mxu0 %v656
        %712 = vmatpush1.msra.mxu0 %v655
        %713 = vmatprep.subr.mxu0 %v659
        %714 = vmatpush1.msra.mxu0 %v658
        %715 = vmatprep.subr.mxu0 %v662
        %716 = vmatpush1.msra.mxu0 %v661
        %717 = vmatprep.subr.mxu0 %v665
        %718 = vmatpush1.msra.mxu0 %v664
        %719 = vmatprep.subr.mxu0 %v668
        %720 = vmatpush1.msra.mxu0 %v667
        %721 = vmatprep.subr.mxu0 %v671
        %722 = vmatpush1.msra.mxu0 %v670
        %723 = vmatprep.subr.mxu0 %v674
        %724 = vmatpush1.msra.mxu0 %v673
        %725 = vmatprep.subr.mxu0 %v677
        %726 = vmatpush1.msra.mxu0 %v676
        %727 = vmatprep.subr.mxu0 %v680
        %728 = vmatpush1.msra.mxu0 %v679
        %729 = vmatprep.subr.mxu0 %v683
        %730 = vmatpush1.msra.mxu0 %v682
        %731 = vmatprep.subr.mxu0 %v686
        %732 = vmatpush1.msra.mxu0 %v685
        %733 = vmatprep.subr.mxu0 %v689
        %734 = vmatpush1.msra.mxu0 %v688
        %735 = vmatprep.subr.mxu0 %v692
        %736 = vmatpush1.msra.mxu0 %v691
        %737 = vmatprep.subr.mxu0 %v695
        %738 = vmatpush1.msra.mxu0 %v694
        %739 = vmatprep.subr.mxu0 %v698
        %740 = vmatpush1.msra.mxu0 %v697
        %741 = vmatprep.subr.mxu0 0.0
        %742 = vmatpush1.msra.mxu0 0.0
        %743 = vmatprep.subr.mxu0 0.0
        %744 = vmatpush1.msra.mxu0 0.0
        %745 = vmatprep.subr.mxu0 0.0
        %746 = vmatpush1.msra.mxu0 0.0
        %747 = vmatprep.subr.mxu0 0.0
        %748 = vmatpush1.msra.mxu0 0.0
        %749 = vmatprep.subr.mxu0 0.0
        %750 = vmatpush1.msra.mxu0 0.0
        %751 = vmatprep.subr.mxu0 0.0
        %752 = vmatpush1.msra.mxu0 0.0
        %753 = vmatprep.subr.mxu0 0.0
        %754 = vmatpush1.msra.mxu0 0.0
        %755 = vmatprep.subr.mxu0 0.0
        %756 = vmatpush1.msra.mxu0 0.0
        %757 = vmatprep.subr.mxu0 0.0
        %758 = vmatpush1.msra.mxu0 0.0
        %759 = vmatprep.subr.mxu0 0.0
        %760 = vmatpush1.msra.mxu0 0.0
        %761 = vmatprep.subr.mxu0 0.0
        %762 = vmatpush1.msra.mxu0 0.0
        %763 = vmatprep.subr.mxu0 0.0
        %764 = vmatpush1.msra.mxu0 0.0
        %765 = vmatprep.subr.mxu0 0.0
        %766 = vmatpush1.msra.mxu0 0.0
        %767 = vmatprep.subr.mxu0 0.0
        %768 = vmatpush1.msra.mxu0 0.0
        %769 = vmatprep.subr.mxu0 0.0
        %770 = vmatpush1.msra.mxu0 0.0
        %771 = vmatprep.subr.mxu0 0.0
        %772 = vmatpush1.msra.mxu0 0.0
        %773 = vmatprep.mubr.f32.mxu0 0.0
        %774 = vmatmul.mubr.f32.gmra.mrb[0].mxu0 %v705
        %v775 = vpop.f32.mrb[0].mxu0
        %v776 = vadd.f32 0.0, %v775
        %v777 = vpop.f32.mrb[0].mxu0
        %v778 = vadd.f32 0.0, %v777
        %779 = vmatprep.mubr.f32.mxu0 0.0
        %780 = vmatmul.mubr.f32.gmra.mrb[0].mxu0 %v706
        %v781 = vpop.f32.mrb[0].mxu0
        %v782 = vadd.f32 0.0, %v781
        %v783 = vpop.f32.mrb[0].mxu0
        %v784 = vadd.f32 0.0, %v783
        %785 = vdwg.mxu0
        %786 = vmatprep.subr.mxu0 0.0
        %787 = vmatpush1.msra.mxu0 %v654
        %788 = vmatprep.subr.mxu0 0.0
        %789 = vmatpush1.msra.mxu0 %v657
        %790 = vmatprep.subr.mxu0 0.0
        %791 = vmatpush1.msra.mxu0 %v660
        %792 = vmatprep.subr.mxu0 0.0
        %793 = vmatpush1.msra.mxu0 %v663
        %794 = vmatprep.subr.mxu0 0.0
        %795 = vmatpush1.msra.mxu0 %v666
        %796 = vmatprep.subr.mxu0 0.0
        %797 = vmatpush1.msra.mxu0 %v669
        %798 = vmatprep.subr.mxu0 0.0
        %799 = vmatpush1.msra.mxu0 %v672
        %800 = vmatprep.subr.mxu0 0.0
        %801 = vmatpush1.msra.mxu0 %v675
        %802 = vmatprep.subr.mxu0 0.0
        %803 = vmatpush1.msra.mxu0 %v678
        %804 = vmatprep.subr.mxu0 0.0
        %805 = vmatpush1.msra.mxu0 %v681
        %806 = vmatprep.subr.mxu0 0.0
        %807 = vmatpush1.msra.mxu0 %v684
        %808 = vmatprep.subr.mxu0 0.0
        %809 = vmatpush1.msra.mxu0 %v687
        %810 = vmatprep.subr.mxu0 0.0
        %811 = vmatpush1.msra.mxu0 %v690
        %812 = vmatprep.subr.mxu0 0.0
        %813 = vmatpush1.msra.mxu0 %v693
        %814 = vmatprep.subr.mxu0 0.0
        %815 = vmatpush1.msra.mxu0 %v696
        %816 = vmatprep.subr.mxu0 0.0
        %817 = vmatpush1.msra.mxu0 %v699
        %818 = vmatprep.subr.mxu0 0.0
        %819 = vmatpush1.msra.mxu0 0.0
        %820 = vmatprep.subr.mxu0 0.0
        %821 = vmatpush1.msra.mxu0 0.0
        %822 = vmatprep.subr.mxu0 0.0
        %823 = vmatpush1.msra.mxu0 0.0
        %824 = vmatprep.subr.mxu0 0.0
        %825 = vmatpush1.msra.mxu0 0.0
        %826 = vmatprep.subr.mxu0 0.0
        %827 = vmatpush1.msra.mxu0 0.0
        %828 = vmatprep.subr.mxu0 0.0
        %829 = vmatpush1.msra.mxu0 0.0
        %830 = vmatprep.subr.mxu0 0.0
        %831 = vmatpush1.msra.mxu0 0.0
        %832 = vmatprep.subr.mxu0 0.0
        %833 = vmatpush1.msra.mxu0 0.0
        %834 = vmatprep.subr.mxu0 0.0
        %835 = vmatpush1.msra.mxu0 0.0
        %836 = vmatprep.subr.mxu0 0.0
        %837 = vmatpush1.msra.mxu0 0.0
        %838 = vmatprep.subr.mxu0 0.0
        %839 = vmatpush1.msra.mxu0 0.0
        %840 = vmatprep.subr.mxu0 0.0
        %841 = vmatpush1.msra.mxu0 0.0
        %842 = vmatprep.subr.mxu0 0.0
        %843 = vmatpush1.msra.mxu0 0.0
        %844 = vmatprep.subr.mxu0 0.0
        %845 = vmatpush1.msra.mxu0 0.0
        %846 = vmatprep.subr.mxu0 0.0
        %847 = vmatpush1.msra.mxu0 0.0
        %848 = vmatprep.subr.mxu0 0.0
        %849 = vmatpush1.msra.mxu0 0.0
        %850 = vmatprep.mubr.f32.mxu0 0.0
        %851 = vmatmul.mubr.f32.gmra.mrb[0].mxu0 %v705
        %v852 = vpop.f32.mrb[0].mxu0
        %v853 = vadd.f32 0.0, %v852
        %v854 = vpop.f32.mrb[0].mxu0
        %855 = vmatprep.mubr.f32.mxu0 0.0
        %856 = vmatmul.mubr.f32.gmra.mrb[0].mxu0 %v706
        %v857 = vpop.f32.mrb[0].mxu0
        %v858 = vadd.f32 0.0, %v857
        %v859 = vpop.f32.mrb[0].mxu0
        %860 = vdwg.mxu0
        %v863 = vrot.slane %v778, 1
        %v864 = vrot.slane %v784, 1
        %v865 = vsel %vm558, %v863, %v864
        %v868 = vadd.f32 %v776, %v865
        %v869 = vadd.f32 %v782, %v864
        %v872 = vrot.slane %v853, 2
        %v873 = vrot.slane %v858, 2
        %v874 = vsel %vm578, %v872, %v873
        %v877 = vadd.f32 %v868, %v874
        %v878 = vadd.f32 %v869, %v873
        %v880 = vlaneseq
        %v881 = vshrl.u32 %v880, 7
        %v882 = vsub.s32 0, %v881
        %v883 = vrot.slane %v700, %v882
        %v885 = vadd.f32 %v877, %v883
        %v886 = vadd.f32 %v878, %v883
        %v887 = vmax.f32 %v885, 0.0
        %v888 = vmax.f32 %v886, 0.0
        %v890 = vunpack.c.l.s4 1966171168
        %v891 = vunpack.c.0.s8 %v890
        %v892 = vlaneseq
        %v893 = vshrl.u32 %v892, 7
        %v894 = vsub.s32 %v891, %v893
        %v895 = vrot.slane %v887, %v894
        %v897 = vunpack.c.l.s4 1966171168
        %v898 = vunpack.c.0.s8 %v897
        %v899 = vlaneseq
        %v900 = vshrl.u32 %v899, 7
        %v901 = vsub.s32 %v898, %v900
        %v902 = vrot.slane %v888, %v901
        %v905 = vrot.slane %v895, 4
        %v906 = vrot.slane %v902, 4
        %v909 = vmax.f32 %v895, %v905
        %v910 = vmax.f32 %v902, %v906
        %v913 = vcombine.low %v909, %v910
        %v915 = vsel %vm578, %v913, 0.0
        %v916 = vrot.slane %v915, 4
        %v917 = vadd.f32 %v915, %v916
        %v918 = vrot.slane %v917, 2
        %v919 = vadd.f32 %v917, %v918
        %v920 = vrot.slane %v919, 1
        %v921 = vadd.f32 %v919, %v920
        %v922 = vrcp.pop 6.0
        %v923 = vmul.f32 %v921, %v922
        %v924 = vld [vmem:[%s5] sm:$0x1]
        %v925 = vld [vmem:[#allocation2] sm:$0x1]
        %v926 = vmul.f32 %v923, %v924
        %vm927 = vcmask 1040384
        %v928 = vsel %vm927, %v926, 0.0
        %929 = vadd.xlane.f32.xlu0 %v928
        %v930 = vpop.xlane.xlu0 %929
        %v931 = vadd.f32 %v930, %v925
        %933 = vset.pattern.permute.xlu0 0
        %934 = vperm.xlu0 %933, %v931
        %v935 = vpop.permute.xlu0 %934
        %937 = vst [vmem:[%s320] sm:$0x1] %v935
        %p938 = scmp.lt.s32.totalorder %s24, 1
        %s939 = scalar_select %p938, %s24, 1
        %s940 = scalar_lea.vmem %s7, %s939
        // Predicated region
        $region61: #{cnn_forward.1} parent=47 // pred_check
          %p941 = pneg %p194
        $region62: #{cnn_forward.1} parent=47 // pred_check_branch
          %943 = sbr.rel (%p941) target = $region64
        $region63: #{cnn_forward.1} parent=47 // pred_region
          _
        $region64: #{cnn_forward.1} parent=47 // pred_fallthru
          _
      $region48: #{cnn_forward.1} parent=5 // pred_fallthru
        _
      %p944 = scmp.le.s32.totalorder 2, %s19
      // Predicated region
      $region65: #{cnn_forward.1} parent=5 // pred_check
        %p945 = pneg %p944
      $region66: #{cnn_forward.1} parent=5 // pred_check_branch
        %947 = sbr.rel (%p945) target = $region68
      $region67: #{cnn_forward.1} parent=5 // pred_region
        %s948 = ssub.s32 %s19, 2
        // Predicated region
        $region69: #{cnn_forward.1} parent=67 // pred_check
          %p949 = pneg %p200
        $region70: #{cnn_forward.1} parent=67 // pred_check_branch
          %951 = sbr.rel (%p949) target = $region72
        $region71: #{cnn_forward.1} parent=67 // pred_region
          %p952 = scmp.lt.s32.totalorder %s25, 1
          %s953 = scalar_select %p952, %s25, 1
          %s954 = scalar_lea.vmem %s7, %s953
        $region72: #{cnn_forward.1} parent=67 // pred_fallthru
          _
      $region68: #{cnn_forward.1} parent=5 // pred_fallthru
        _
    $region6: #{cnn_forward.1} parent=1 // loop_footer
      %s23 = sadd.s32 1, %s19
    $region7: #{cnn_forward.1} parent=1 // loop_footer_branch
      %18 = sbr.rel target = $region3
    $region8: #{cnn_forward.1} parent=1 // loop_exit
      _
    %955 = vsyncpa [#allocation4], 1
    %s956 = scalar_lea.sflag [#allocation4], 1
    %957 = vsyncpa %s956, 1
    %958 = vsyncpa [#allocation6], 1

</llo_original>
